<compile_context>
chip_gen: v7x
topology: tpu7x:2x2x1
jax: 0.10.0
libtpu: 0.0.40
codegen_flags: <defaults>
</compile_context>

<pallas_src>
import jax
import jax.numpy as jnp
from jax.experimental import pallas as pl
from jax.experimental.pallas import tpu as pltpu


def _round_up(n: int, m: int) -> int:
    return ((n + m - 1) // m) * m


def _vmem_capacity_bytes() -> int:
    """Per-TensorCore VMEM capacity; conservative fallback if the query fails."""
    try:
        info = pltpu.get_tpu_info()
        cap = getattr(info, "vmem_capacity_bytes", None)
        if cap:
            return int(cap)
    except Exception:
        pass
    return 64 * 1024 * 1024   # v7x per-core size: safe lower bound everywhere


# ----------------------------- kernels --------------------------------------

def _fused_kernel(x_ref, w1_ref, b1_ref, w2_ref, b2_ref, o_ref):
    # Cast the x tile to the compute dtype *inside* the kernel (no extra HBM
    # pass over the activations in the wrapper).
    x = x_ref[...].astype(w1_ref.dtype)
    # Linear 1 on the MXU, f32 accumulation.
    h = jnp.dot(x, w1_ref[...], preferred_element_type=jnp.float32)
    # Bias + ReLU in f32 (BatchNorm/Dropout are Identity for the default config).
    h = jnp.maximum(h + b1_ref[...], 0.0)
    # Linear 2 on the MXU, f32 accumulation.
    out = jnp.dot(h.astype(w2_ref.dtype), w2_ref[...],
                  preferred_element_type=jnp.float32)
    o_ref[...] = (out + b2_ref[...]).astype(o_ref.dtype)


def _hidden_tiled_kernel(x_ref, w1_ref, b1_ref, w2_ref, b2_ref, o_ref, acc_ref):
    # Capacity fallback: W1 columns / W2 rows streamed over grid axis 1
    # (reduction), output accumulated in an f32 VMEM scratch.
    k = pl.program_id(1)

    @pl.when(k == 0)
    def _():
        acc_ref[...] = jnp.zeros_like(acc_ref)

    x = x_ref[...].astype(w1_ref.dtype)
    h = jnp.dot(x, w1_ref[...], preferred_element_type=jnp.float32)
    h = jnp.maximum(h + b1_ref[...], 0.0)      # per-hidden-unit bias+ReLU: exact under tiling
    acc_ref[...] += jnp.dot(h.astype(w2_ref.dtype), w2_ref[...],
                            preferred_element_type=jnp.float32)

    @pl.when(k == pl.num_programs(1) - 1)
    def _():
        o_ref[...] = (acc_ref[...] + b2_ref[...]).astype(o_ref.dtype)


# ----------------------------- wrapper ---------------------------------------

def association_network(x, w1, b1, w2, b2, *, tb=None, th=None,
                        compute_dtype=None, vmem_budget_bytes=None,
                        x_buffer_count=2):
    """Fused forward of AssociationNetwork.

    x:  (B, input_size)
    w1: (input_size, hidden_size)   (transposed vs. torch Linear.weight)
    b1: (hidden_size,)
    w2: (hidden_size, output_size)
    b2: (output_size,)
    compute_dtype: None keeps x.dtype for the matmul operands; jnp.bfloat16 is
      worthwhile on every generation (bf16-native MXU incl. v5e); accumulation
      stays f32.  The cast happens per-tile inside the kernel, so HBM traffic
      for x is unchanged (pass x already in bf16 if you want the bandwidth win).
    x_buffer_count: sweep to 3 if profiling shows exposed DMA on the x stream.
    """
    B, in_size = x.shape
    hidden = w1.shape[1]
    out_size = w2.shape[1]
    assert w1.shape == (in_size, hidden) and b1.shape == (hidden,)
    assert w2.shape == (hidden, out_size) and b2.shape == (out_size,)

    out_dtype = x.dtype
    cdt = jnp.dtype(x.dtype if compute_dtype is None else compute_dtype)
    xsz = jnp.dtype(x.dtype).itemsize
    isz = cdt.itemsize
    osz = jnp.dtype(out_dtype).itemsize

    # Lane/sublane-rounded sizes used ONLY for VMEM accounting (the data itself
    # is not padded on the main path: full-extent feature blocks are legal).
    in_r = _round_up(in_size, 128)
    hid_r = _round_up(hidden, 128)
    out_r = _round_up(out_size, 128)

    # ---- generation-aware VMEM budget ---------------------------------------
    vmem_cap = _vmem_capacity_bytes()
    if vmem_budget_bytes is None:
        vmem_budget_bytes = int(vmem_cap * 0.65)     # headroom for compiler temps
    budget = int(vmem_budget_bytes)
    vmem_limit = int(min(int(vmem_cap * 0.90), budget + (16 << 20)))

    # Resident weights/biases (single-buffered: constant index_maps + Buffered(1)).
    weight_bytes = (in_r * hid_r + hid_r * out_r) * isz + (hid_r + out_r) * 4
    # Per batch-row VMEM: x tile and out tile double-buffered, plus the f32
    # intermediates h (hid) and the pre-cast second-matmul result (out).
    per_row_main = 2 * in_r * xsz + 2 * out_r * osz + (hid_r + out_r) * 4

    use_fused = (th is None) and (weight_bytes + 128 * per_row_main <= budget)

    def _pick_tb(tb_vmem):
        # Prefer the 512-1024 row sweet spot; don't force deep grids.  Rebalance
        # rows across the resulting step count so the last tile is not tiny.
        tb0 = min(int(tb_vmem), 1024, _round_up(B, 8))
        tb0 = max(8, (tb0 // 8) * 8)
        nb0 = pl.cdiv(B, tb0)
        return max(8, _round_up(pl.cdiv(B, nb0), 8))

    x_mode = {} if x_buffer_count == 2 else {"pipeline_mode": pl.Buffered(x_buffer_count)}

    # ======================= main path: weights resident =====================
    if use_fused:
        if tb is None:
            tb_vmem = max(8, (budget - weight_bytes) // per_row_main)
            tb = _pick_tb(tb_vmem)
        tb = max(8, min((tb // 8) * 8, _round_up(B, 8)))
        nb = pl.cdiv(B, tb)

        w1c = w1.astype(cdt)
        w2c = w2.astype(cdt)
        b1f = b1.astype(jnp.float32).reshape(1, hidden)
        b2f = b2.astype(jnp.float32).reshape(1, out_size)

        cost = pl.CostEstimate(
            flops=2 * B * (in_size * hidden + hidden * out_size),
            transcendentals=0,
            bytes_accessed=B * in_size * xsz + B * out_size * osz
                           + (in_size * hidden + hidden * out_size) * isz
                           + (hidden + out_size) * 4)

        def _call(single_buffer_consts):
            cmode = ({"pipeline_mode": pl.Buffered(1)} if single_buffer_consts else {})
            return pl.pallas_call(
                _fused_kernel,
                out_shape=jax.ShapeDtypeStruct((B, out_size), out_dtype),
                grid_spec=pltpu.PrefetchScalarGridSpec(
                    num_scalar_prefetch=0,
                    grid=(nb,),
                    in_specs=[
                        pl.BlockSpec((tb, in_size), lambda i: (i, 0), **x_mode),
                        pl.BlockSpec((in_size, hidden), lambda i: (0, 0), **cmode),
                        pl.BlockSpec((1, hidden), lambda i: (0, 0), **cmode),
                        pl.BlockSpec((hidden, out_size), lambda i: (0, 0), **cmode),
                        pl.BlockSpec((1, out_size), lambda i: (0, 0), **cmode),
                    ],
                    out_specs=pl.BlockSpec((tb, out_size), lambda i: (i, 0)),
                ),
                compiler_params=pltpu.CompilerParams(
                    dimension_semantics=("parallel",),     # megacore-shards the batch axis
                    vmem_limit_bytes=vmem_limit),
                cost_estimate=cost,
            )(x, w1c, b1f, w2c, b2f)

        try:
            return _call(True)
        except Exception:
            # pipeline_mode=Buffered(1) unsupported on this jax version:
            # retry with default double-buffered constants (same semantics).
            return _call(False)

    # ============== fallback: hidden dim streamed over a reduction axis ======
    if th is None:
        per_th = 2 * (in_r + out_r) * isz + 2 * 4        # double-buffered W1 col + W2 row + b1
        th = ((budget // 2) // per_th) // 128 * 128
        th = max(128, min(th, hid_r))
    th = max(128, (th // 128) * 128)
    hid_p = _round_up(hidden, th)
    nk = hid_p // th

    if tb is None:
        fixed = (2 * (in_r + out_r) * isz + 2 * 4) * th + out_r * 4
        per_row = 2 * in_r * xsz + 2 * out_r * osz + th * 4 + out_r * 4
        tb = _pick_tb(max(8, (budget - fixed) // per_row))
    tb = max(8, min((tb // 8) * 8, _round_up(B, 8)))
    nb = pl.cdiv(B, tb)

    # Zero-padding the hidden dim is exact: padded units yield ReLU(0)=0 and
    # multiply zero rows of W2.
    w1_p = jnp.pad(w1, ((0, 0), (0, hid_p - hidden))).astype(cdt)
    b1_p = jnp.pad(b1.astype(jnp.float32), (0, hid_p - hidden)).reshape(1, hid_p)
    w2_p = jnp.pad(w2, ((0, hid_p - hidden), (0, 0))).astype(cdt)
    b2_f = b2.astype(jnp.float32).reshape(1, out_size)

    cost = pl.CostEstimate(
        flops=2 * B * (in_size * hid_p + hid_p * out_size),
        transcendentals=0,
        bytes_accessed=B * in_size * xsz + B * out_size * osz
                       + nb * (in_size * hid_p + hid_p * out_size) * isz)

    def _call2(single_buffer_consts):
        cmode = ({"pipeline_mode": pl.Buffered(1)} if single_buffer_consts else {})
        return pl.pallas_call(
            _hidden_tiled_kernel,
            out_shape=jax.ShapeDtypeStruct((B, out_size), out_dtype),
            grid_spec=pltpu.PrefetchScalarGridSpec(
                num_scalar_prefetch=0,
                grid=(nb, nk),
                in_specs=[
                    pl.BlockSpec((tb, in_size), lambda i, k: (i, 0), **x_mode),
                    pl.BlockSpec((in_size, th), lambda i, k: (0, k)),
                    pl.BlockSpec((1, th), lambda i, k: (0, k)),
                    pl.BlockSpec((th, out_size), lambda i, k: (k, 0)),
                    pl.BlockSpec((1, out_size), lambda i, k: (0, 0), **cmode),
                ],
                out_specs=pl.BlockSpec((tb, out_size), lambda i, k: (i, 0)),
                scratch_shapes=[pltpu.VMEM((tb, out_size), jnp.float32)],
            ),
            compiler_params=pltpu.CompilerParams(
                dimension_semantics=("parallel", "arbitrary"),
                vmem_limit_bytes=vmem_limit),
            cost_estimate=cost,
        )(x, w1_p, b1_p, w2_p, b2_f)

    try:
        return _call2(True)
    except Exception:
        return _call2(False)


def reference_forward(x, w1, b1, w2, b2):
    hp = jax.lax.Precision.HIGHEST
    h = jnp.maximum(jnp.dot(x, w1, precision=hp) + b1, 0.0)
    return jnp.dot(h, w2, precision=hp) + b2


if __name__ == "__main__":
    # Small shapes consistent with the module forward (x is (batch, input_size)).
    batch, input_size, hidden_size, output_size = 8, 32, 32, 16

    key = jax.random.PRNGKey(0)
    (kx, kw1, kb1, kw2, kb2, kx2, kx3, kw3, kb3, kw4, kb4, _) = jax.random.split(key, 12)

    # PyTorch-style uniform(-1/sqrt(fan_in), +1/sqrt(fan_in)) init.
    bound1 = 1.0 / (input_size ** 0.5)
    bound2 = 1.0 / (hidden_size ** 0.5)
    x = jax.random.normal(kx, (batch, input_size), dtype=jnp.float32)
    w1 = jax.random.uniform(kw1, (input_size, hidden_size), jnp.float32, -bound1, bound1)
    b1 = jax.random.uniform(kb1, (hidden_size,), jnp.float32, -bound1, bound1)
    w2 = jax.random.uniform(kw2, (hidden_size, output_size), jnp.float32, -bound2, bound2)
    b2 = jax.random.uniform(kb2, (output_size,), jnp.float32, -bound2, bound2)

    ref = reference_forward(x, w1, b1, w2, b2)

    # f32 path.  Tolerance absorbs MXU f32 pass-decomposition differences vs XLA.
    out = jax.block_until_ready(association_network(x, w1, b1, w2, b2))
    assert out.shape == (batch, output_size)
    assert jnp.allclose(out, ref, atol=5e-3, rtol=5e-3)

    # bf16 compute path (bf16 MXU cadence on every generation; f32 accumulation).
    out_bf16 = jax.block_until_ready(
        association_network(x, w1, b1, w2, b2, compute_dtype=jnp.bfloat16))
    assert out_bf16.shape == (batch, output_size)
    assert jnp.allclose(out_bf16, ref, atol=5e-2, rtol=5e-2)

    # Batch-tiled grid with a partial last tile (exercises the pipelined grid).
    B2 = 1000
    x2 = jax.random.normal(kx2, (B2, input_size), dtype=jnp.float32)
    out2 = jax.block_until_ready(association_network(x2, w1, b1, w2, b2, tb=256))
    assert out2.shape == (B2, output_size)
    assert jnp.allclose(out2, reference_forward(x2, w1, b1, w2, b2), atol=5e-3, rtol=5e-3)

    # Capacity-fallback path: tiny VMEM budget forces hidden-dim streaming over
    # the reduction grid axis with the f32 accumulator (the v7x escape hatch).
    in3, hid3, out3, B3 = 64, 384, 96, 64
    b31 = 1.0 / (in3 ** 0.5)
    b32 = 1.0 / (hid3 ** 0.5)
    x3 = jax.random.normal(kx3, (B3, in3), dtype=jnp.float32)
    w3 = jax.random.uniform(kw3, (in3, hid3), jnp.float32, -b31, b31)
    bb3 = jax.random.uniform(kb3, (hid3,), jnp.float32, -b31, b31)
    w4 = jax.random.uniform(kw4, (hid3, out3), jnp.float32, -b32, b32)
    bb4 = jax.random.uniform(kb4, (out3,), jnp.float32, -b32, b32)
    out3_arr = jax.block_until_ready(
        association_network(x3, w3, bb3, w4, bb4, vmem_budget_bytes=512 * 1024))
    assert out3_arr.shape == (B3, out3)
    assert jnp.allclose(out3_arr, reference_forward(x3, w3, bb3, w4, bb4),
                        atol=5e-3, rtol=5e-3)

    print("KERNEL_OK")
</pallas_src>

<mosaic_0001>
module attributes {stable_mosaic.version = 11 : i64} {
  func.func @_fused_kernel(%arg0: i32, %arg1: memref<8x32xf32, #tpu.memory_space<vmem>>, %arg2: memref<32x32xf32, #tpu.memory_space<vmem>>, %arg3: memref<1x32xf32, #tpu.memory_space<vmem>>, %arg4: memref<32x16xf32, #tpu.memory_space<vmem>>, %arg5: memref<1x16xf32, #tpu.memory_space<vmem>>, %arg6: memref<8x16xf32, #tpu.memory_space<vmem>>) attributes {dimension_semantics = [#tpu.dimension_semantics<parallel>], iteration_bounds = array<i64: 1>, scalar_prefetch = 0 : i64, scratch_operands = 0 : i64, tpu.core_type = #tpu.core_type<tc>, window_params = [{transform_indices = @transform_0, window_bounds = array<i64: 8, 32>}, {pipeline_mode = #tpu.pipeline_mode<synchronous>, transform_indices = @transform_1, window_bounds = array<i64: 32, 32>}, {pipeline_mode = #tpu.pipeline_mode<synchronous>, transform_indices = @transform_2, window_bounds = array<i64: 1, 32>}, {pipeline_mode = #tpu.pipeline_mode<synchronous>, transform_indices = @transform_3, window_bounds = array<i64: 32, 16>}, {pipeline_mode = #tpu.pipeline_mode<synchronous>, transform_indices = @transform_4, window_bounds = array<i64: 1, 16>}, {transform_indices = @transform_5, window_bounds = array<i64: 8, 16>}]} {
    %c0 = arith.constant 0 : index
    %c0_0 = arith.constant 0 : index
    %0 = vector.load %arg1[%c0, %c0_0] : memref<8x32xf32, #tpu.memory_space<vmem>>, vector<8x32xf32>
    %c0_1 = arith.constant 0 : index
    %c0_2 = arith.constant 0 : index
    %1 = vector.load %arg2[%c0_1, %c0_2] : memref<32x32xf32, #tpu.memory_space<vmem>>, vector<32x32xf32>
    %cst = arith.constant dense<0.000000e+00> : vector<8x32xf32>
    %2 = tpu.matmul %0, %1, %cst {dimension_numbers = #tpu.dot_dimension_numbers<[1], [0], [0], [1], [0, 0, 1, 1], [], []>} : vector<8x32xf32>, vector<32x32xf32>, vector<8x32xf32> -> vector<8x32xf32>
    %c0_3 = arith.constant 0 : index
    %c0_4 = arith.constant 0 : index
    %3 = vector.load %arg3[%c0_3, %c0_4] : memref<1x32xf32, #tpu.memory_space<vmem>>, vector<1x32xf32>
    %4 = vector.broadcast %3 : vector<1x32xf32> to vector<8x32xf32>
    %5 = arith.addf %2, %4 : vector<8x32xf32>
    %cst_5 = arith.constant 0.000000e+00 : f32
    %6 = vector.broadcast %cst_5 : f32 to vector<8x32xf32>
    %7 = arith.maximumf %5, %6 : vector<8x32xf32>
    %c0_6 = arith.constant 0 : index
    %c0_7 = arith.constant 0 : index
    %8 = vector.load %arg4[%c0_6, %c0_7] : memref<32x16xf32, #tpu.memory_space<vmem>>, vector<32x16xf32>
    %cst_8 = arith.constant dense<0.000000e+00> : vector<8x16xf32>
    %9 = tpu.matmul %7, %8, %cst_8 {dimension_numbers = #tpu.dot_dimension_numbers<[1], [0], [0], [1], [0, 0, 1, 1], [], []>} : vector<8x32xf32>, vector<32x16xf32>, vector<8x16xf32> -> vector<8x16xf32>
    %c0_9 = arith.constant 0 : index
    %c0_10 = arith.constant 0 : index
    %10 = vector.load %arg5[%c0_9, %c0_10] : memref<1x16xf32, #tpu.memory_space<vmem>>, vector<1x16xf32>
    %11 = vector.broadcast %10 : vector<1x16xf32> to vector<8x16xf32>
    %12 = arith.addf %9, %11 : vector<8x16xf32>
    %c0_11 = arith.constant 0 : index
    %c0_12 = arith.constant 0 : index
    %13 = vector.load %arg6[%c0_11, %c0_12] : memref<8x16xf32, #tpu.memory_space<vmem>>, vector<8x16xf32>
    tpu.vector_store %arg6[%c0_11, %c0_12], %12 {strides = array<i32>} : memref<8x16xf32, #tpu.memory_space<vmem>>, vector<8x16xf32>,
    return
  }
  func.func @transform_0(%arg0: i32) -> (i32, i32) {
    %c0_i32 = arith.constant 0 : i32
    %c0_i32_0 = arith.constant 0 : i32
    return %arg0, %c0_i32 : i32, i32
  }
  func.func @transform_1(%arg0: i32) -> (i32, i32) {
    %c0_i32 = arith.constant 0 : i32
    %c0_i32_0 = arith.constant 0 : i32
    %c0_i32_1 = arith.constant 0 : i32
    return %c0_i32, %c0_i32_0 : i32, i32
  }
  func.func @transform_2(%arg0: i32) -> (i32, i32) {
    %c0_i32 = arith.constant 0 : i32
    %c0_i32_0 = arith.constant 0 : i32
    %c0_i32_1 = arith.constant 0 : i32
    return %c0_i32, %c0_i32_0 : i32, i32
  }
  func.func @transform_3(%arg0: i32) -> (i32, i32) {
    %c0_i32 = arith.constant 0 : i32
    %c0_i32_0 = arith.constant 0 : i32
    %c0_i32_1 = arith.constant 0 : i32
    return %c0_i32, %c0_i32_0 : i32, i32
  }
  func.func @transform_4(%arg0: i32) -> (i32, i32) {
    %c0_i32 = arith.constant 0 : i32
    %c0_i32_0 = arith.constant 0 : i32
    %c0_i32_1 = arith.constant 0 : i32
    return %c0_i32, %c0_i32_0 : i32, i32
  }
  func.func @transform_5(%arg0: i32) -> (i32, i32) {
    %c0_i32 = arith.constant 0 : i32
    %c0_i32_0 = arith.constant 0 : i32
    return %arg0, %c0_i32 : i32, i32
  }
}

module attributes {stable_mosaic.version = 11 : i64} {
  func.func @_fused_kernel(%arg0: i32, %arg1: memref<8x32xf32, #tpu.memory_space<vmem>>, %arg2: memref<32x32xf32, #tpu.memory_space<vmem>>, %arg3: memref<1x32xf32, #tpu.memory_space<vmem>>, %arg4: memref<32x16xf32, #tpu.memory_space<vmem>>, %arg5: memref<1x16xf32, #tpu.memory_space<vmem>>, %arg6: memref<8x16xf32, #tpu.memory_space<vmem>>) attributes {dimension_semantics = [#tpu.dimension_semantics<parallel>], iteration_bounds = array<i64: 1>, scalar_prefetch = 0 : i64, scratch_operands = 0 : i64, tpu.core_type = #tpu.core_type<tc>, window_params = [{transform_indices = @transform_0, window_bounds = array<i64: 8, 32>}, {pipeline_mode = #tpu.pipeline_mode<synchronous>, transform_indices = @transform_1, window_bounds = array<i64: 32, 32>}, {pipeline_mode = #tpu.pipeline_mode<synchronous>, transform_indices = @transform_2, window_bounds = array<i64: 1, 32>}, {pipeline_mode = #tpu.pipeline_mode<synchronous>, transform_indices = @transform_3, window_bounds = array<i64: 32, 16>}, {pipeline_mode = #tpu.pipeline_mode<synchronous>, transform_indices = @transform_4, window_bounds = array<i64: 1, 16>}, {transform_indices = @transform_5, window_bounds = array<i64: 8, 16>}]} {
    %c0 = arith.constant 0 : index
    %c0_0 = arith.constant 0 : index
    %0 = vector.load %arg1[%c0, %c0_0] : memref<8x32xf32, #tpu.memory_space<vmem>>, vector<8x32xf32>
    %c0_1 = arith.constant 0 : index
    %c0_2 = arith.constant 0 : index
    %1 = vector.load %arg2[%c0_1, %c0_2] : memref<32x32xf32, #tpu.memory_space<vmem>>, vector<32x32xf32>
    %cst = arith.constant dense<0.000000e+00> : vector<8x32xf32>
    %2 = tpu.matmul %0, %1, %cst {dimension_numbers = #tpu.dot_dimension_numbers<[1], [0], [0], [1], [0, 0, 1, 1], [], []>} : vector<8x32xf32>, vector<32x32xf32>, vector<8x32xf32> -> vector<8x32xf32>
    %c0_3 = arith.constant 0 : index
    %c0_4 = arith.constant 0 : index
    %3 = vector.load %arg3[%c0_3, %c0_4] : memref<1x32xf32, #tpu.memory_space<vmem>>, vector<1x32xf32>
    %4 = vector.broadcast %3 : vector<1x32xf32> to vector<8x32xf32>
    %5 = arith.addf %2, %4 : vector<8x32xf32>
    %cst_5 = arith.constant 0.000000e+00 : f32
    %6 = vector.broadcast %cst_5 : f32 to vector<8x32xf32>
    %7 = arith.maximumf %5, %6 : vector<8x32xf32>
    %c0_6 = arith.constant 0 : index
    %c0_7 = arith.constant 0 : index
    %8 = vector.load %arg4[%c0_6, %c0_7] : memref<32x16xf32, #tpu.memory_space<vmem>>, vector<32x16xf32>
    %cst_8 = arith.constant dense<0.000000e+00> : vector<8x16xf32>
    %9 = tpu.matmul %7, %8, %cst_8 {dimension_numbers = #tpu.dot_dimension_numbers<[1], [0], [0], [1], [0, 0, 1, 1], [], []>} : vector<8x32xf32>, vector<32x16xf32>, vector<8x16xf32> -> vector<8x16xf32>
    %c0_9 = arith.constant 0 : index
    %c0_10 = arith.constant 0 : index
    %10 = vector.load %arg5[%c0_9, %c0_10] : memref<1x16xf32, #tpu.memory_space<vmem>>, vector<1x16xf32>
    %11 = vector.broadcast %10 : vector<1x16xf32> to vector<8x16xf32>
    %12 = arith.addf %9, %11 : vector<8x16xf32>
    %c0_11 = arith.constant 0 : index
    %c0_12 = arith.constant 0 : index
    %13 = vector.load %arg6[%c0_11, %c0_12] : memref<8x16xf32, #tpu.memory_space<vmem>>, vector<8x16xf32>
    tpu.vector_store %arg6[%c0_11, %c0_12], %12 {strides = array<i32>} : memref<8x16xf32, #tpu.memory_space<vmem>>, vector<8x16xf32>,
    return
  }
  func.func @transform_0(%arg0: i32) -> (i32, i32) {
    %c0_i32 = arith.constant 0 : i32
    %c0_i32_0 = arith.constant 0 : i32
    return %arg0, %c0_i32 : i32, i32
  }
  func.func @transform_1(%arg0: i32) -> (i32, i32) {
    %c0_i32 = arith.constant 0 : i32
    %c0_i32_0 = arith.constant 0 : i32
    %c0_i32_1 = arith.constant 0 : i32
    return %c0_i32, %c0_i32_0 : i32, i32
  }
  func.func @transform_2(%arg0: i32) -> (i32, i32) {
    %c0_i32 = arith.constant 0 : i32
    %c0_i32_0 = arith.constant 0 : i32
    %c0_i32_1 = arith.constant 0 : i32
    return %c0_i32, %c0_i32_0 : i32, i32
  }
  func.func @transform_3(%arg0: i32) -> (i32, i32) {
    %c0_i32 = arith.constant 0 : i32
    %c0_i32_0 = arith.constant 0 : i32
    %c0_i32_1 = arith.constant 0 : i32
    return %c0_i32, %c0_i32_0 : i32, i32
  }
  func.func @transform_4(%arg0: i32) -> (i32, i32) {
    %c0_i32 = arith.constant 0 : i32
    %c0_i32_0 = arith.constant 0 : i32
    %c0_i32_1 = arith.constant 0 : i32
    return %c0_i32, %c0_i32_0 : i32, i32
  }
  func.func @transform_5(%arg0: i32) -> (i32, i32) {
    %c0_i32 = arith.constant 0 : i32
    %c0_i32_0 = arith.constant 0 : i32
    return %arg0, %c0_i32 : i32, i32
  }
}

</mosaic_0001>

<llo_original>
// kernel: tpu_custom_call.1
$region0: #{tpu_custom_call.1}
  #allocation0 [shape = 'u32[]', space=smem, size = 0x4, offset = 0x4, fixed_abs, tag = 'smem constant byte address 0x4 - core index']
  #allocation1 [shape = 'u32[144,128]{1,0:T(1,128)}', space=vmem, size = 0x12000, scoped, tag = 'internal scratch']
  %s0 = inlined_call_operand.vmem [shape: f32[8,32], index: 0, kind: input, shape index: {}]
  %s1 = inlined_call_operand.vmem [shape: f32[32,32], index: 1, kind: input, shape index: {}]
  %s2 = inlined_call_operand.vmem [shape: f32[1,32], index: 2, kind: input, shape index: {}]
  %s3 = inlined_call_operand.vmem [shape: f32[32,16], index: 3, kind: input, shape index: {}]
  %s4 = inlined_call_operand.vmem [shape: f32[1,16], index: 4, kind: input, shape index: {}]
  %s5 = inlined_call_operand.hbm [shape: f32[8,16], index: 5, kind: output, shape index: {}]
  %s6 = sld [smem:[#allocation0]]
  $region30: #{tpu_custom_call.1} parent=0
    _
  %s8 = ssub.s32 1, %s6
  %s9 = scalar_select 0, %s8, %s6
  $region1: #{tpu_custom_call.1} parent=0
    #allocation2 [shape = 'u8[4096]{0}', space=vmem, size = 0x1000, scoped, tag = 'output window, operand 0, single buffered']
    #allocation3 [shape = 's32[1]{0}', space=sflag, size = 0x4, scoped, tag = 'scoped memory for tpu_custom_call.1']
    %10 = vsyncpa [#allocation3], 0
    // Predicated region
    $region2: #{tpu_custom_call.1} parent=1 // pred_check
      _
    $region3: #{tpu_custom_call.1} parent=1 // pred_check_branch
      %12 = sbr.rel (0) target = $region5
    $region4: #{tpu_custom_call.1} parent=1 // pred_region
      _
    $region5: #{tpu_custom_call.1} parent=1 // pred_fallthru
      _
    // Predicated region
    $region6: #{tpu_custom_call.1} parent=1 // pred_check
      _
    $region7: #{tpu_custom_call.1} parent=1 // pred_check_branch
      %14 = sbr.rel (0) target = $region9
    $region8: #{tpu_custom_call.1} parent=1 // pred_region
      _
    $region9: #{tpu_custom_call.1} parent=1 // pred_fallthru
      _
    // Predicated region
    $region10: #{tpu_custom_call.1} parent=1 // pred_check
      _
    $region11: #{tpu_custom_call.1} parent=1 // pred_check_branch
      %16 = sbr.rel (0) target = $region13
    $region12: #{tpu_custom_call.1} parent=1 // pred_region
      _
    $region13: #{tpu_custom_call.1} parent=1 // pred_fallthru
      _
    // Predicated region
    $region14: #{tpu_custom_call.1} parent=1 // pred_check
      _
    $region15: #{tpu_custom_call.1} parent=1 // pred_check_branch
      %18 = sbr.rel (0) target = $region17
    $region16: #{tpu_custom_call.1} parent=1 // pred_region
      _
    $region17: #{tpu_custom_call.1} parent=1 // pred_fallthru
      _
    // Predicated region
    $region18: #{tpu_custom_call.1} parent=1 // pred_check
      _
    $region19: #{tpu_custom_call.1} parent=1 // pred_check_branch
      %20 = sbr.rel (0) target = $region21
    $region20: #{tpu_custom_call.1} parent=1 // pred_region
      _
    $region21: #{tpu_custom_call.1} parent=1 // pred_fallthru
      _
    %v21 = vld [vmem:[%s0] sm:$0xff]
    %v22 = vld [vmem:[%s1] sm:$0xff]
    %v23 = vld [vmem:[%s1 + $0x8] sm:$0xff]
    %v24 = vld [vmem:[%s1 + $0x10] sm:$0xff]
    %v25 = vld [vmem:[%s1 + $0x18] sm:$0xff]
    %v26 = vld [vmem:[%s2] sm:$0x1]
    %v28 = vlaneseq
    %v29 = vshrl.u32 %v28, 7
    %v30 = vsub.s32 0, %v29
    %v31 = vrot.slane %v26, %v30
    %vm33 = vcmask 261120
    %v35 = vsel %vm33, %v21, 0
    %37 = vmatprep.subr.mxu0 0.0
    %38 = vmatpush1.msra.mxu0 %v22
    %39 = vmatprep.subr.mxu0 0.0
    %40 = vmatpush1.msra.mxu0 %v23
    %41 = vmatprep.subr.mxu0 0.0
    %42 = vmatpush1.msra.mxu0 %v24
    %43 = vmatprep.subr.mxu0 0.0
    %44 = vmatpush1.msra.mxu0 %v25
    %45 = vmatprep.subr.mxu0 0.0
    %46 = vmatpush1.msra.mxu0 0.0
    %47 = vmatprep.subr.mxu0 0.0
    %48 = vmatpush1.msra.mxu0 0.0
    %49 = vmatprep.subr.mxu0 0.0
    %50 = vmatpush1.msra.mxu0 0.0
    %51 = vmatprep.subr.mxu0 0.0
    %52 = vmatpush1.msra.mxu0 0.0
    %53 = vmatprep.subr.mxu0 0.0
    %54 = vmatpush1.msra.mxu0 0.0
    %55 = vmatprep.subr.mxu0 0.0
    %56 = vmatpush1.msra.mxu0 0.0
    %57 = vmatprep.subr.mxu0 0.0
    %58 = vmatpush1.msra.mxu0 0.0
    %59 = vmatprep.subr.mxu0 0.0
    %60 = vmatpush1.msra.mxu0 0.0
    %61 = vmatprep.subr.mxu0 0.0
    %62 = vmatpush1.msra.mxu0 0.0
    %63 = vmatprep.subr.mxu0 0.0
    %64 = vmatpush1.msra.mxu0 0.0
    %65 = vmatprep.subr.mxu0 0.0
    %66 = vmatpush1.msra.mxu0 0.0
    %67 = vmatprep.subr.mxu0 0.0
    %68 = vmatpush1.msra.mxu0 0.0
    %69 = vmatprep.subr.mxu0 0.0
    %70 = vmatpush1.msra.mxu0 0.0
    %71 = vmatprep.subr.mxu0 0.0
    %72 = vmatpush1.msra.mxu0 0.0
    %73 = vmatprep.subr.mxu0 0.0
    %74 = vmatpush1.msra.mxu0 0.0
    %75 = vmatprep.subr.mxu0 0.0
    %76 = vmatpush1.msra.mxu0 0.0
    %77 = vmatprep.subr.mxu0 0.0
    %78 = vmatpush1.msra.mxu0 0.0
    %79 = vmatprep.subr.mxu0 0.0
    %80 = vmatpush1.msra.mxu0 0.0
    %81 = vmatprep.subr.mxu0 0.0
    %82 = vmatpush1.msra.mxu0 0.0
    %83 = vmatprep.subr.mxu0 0.0
    %84 = vmatpush1.msra.mxu0 0.0
    %85 = vmatprep.subr.mxu0 0.0
    %86 = vmatpush1.msra.mxu0 0.0
    %87 = vmatprep.subr.mxu0 0.0
    %88 = vmatpush1.msra.mxu0 0.0
    %89 = vmatprep.subr.mxu0 0.0
    %90 = vmatpush1.msra.mxu0 0.0
    %91 = vmatprep.subr.mxu0 0.0
    %92 = vmatpush1.msra.mxu0 0.0
    %93 = vmatprep.subr.mxu0 0.0
    %94 = vmatpush1.msra.mxu0 0.0
    %95 = vmatprep.subr.mxu0 0.0
    %96 = vmatpush1.msra.mxu0 0.0
    %97 = vmatprep.subr.mxu0 0.0
    %98 = vmatpush1.msra.mxu0 0.0
    %99 = vmatprep.subr.mxu0 0.0
    %100 = vmatpush1.msra.mxu0 0.0
    %101 = vmatprep.mubr.f32.mxu0 0.0
    %102 = vmatmul.mubr.f32.gmra.mrb[0].mxu0 %v35
    %v103 = vpop.f32.mrb[0].mxu0
    %v104 = vadd.f32 %v31, %v103
    %v105 = vpop.f32.mrb[0].mxu0
    %106 = vdwg.mxu0
    %v107 = vmax.f32 %v104, 0.0
    %v108 = vld [vmem:[%s3] sm:$0xff]
    %v109 = vld [vmem:[%s3 + $0x8] sm:$0xff]
    %v110 = vld [vmem:[%s3 + $0x10] sm:$0xff]
    %v111 = vld [vmem:[%s3 + $0x18] sm:$0xff]
    %v112 = vld [vmem:[%s4] sm:$0x1]
    %v114 = vlaneseq
    %v115 = vshrl.u32 %v114, 7
    %v116 = vsub.s32 0, %v115
    %v117 = vrot.slane %v112, %v116
    %v120 = vsel %vm33, %v107, 0
    %122 = vmatprep.subr.mxu0 0.0
    %123 = vmatpush1.msra.mxu0 %v108
    %124 = vmatprep.subr.mxu0 0.0
    %125 = vmatpush1.msra.mxu0 %v109
    %126 = vmatprep.subr.mxu0 0.0
    %127 = vmatpush1.msra.mxu0 %v110
    %128 = vmatprep.subr.mxu0 0.0
    %129 = vmatpush1.msra.mxu0 %v111
    %130 = vmatprep.subr.mxu0 0.0
    %131 = vmatpush1.msra.mxu0 0.0
    %132 = vmatprep.subr.mxu0 0.0
    %133 = vmatpush1.msra.mxu0 0.0
    %134 = vmatprep.subr.mxu0 0.0
    %135 = vmatpush1.msra.mxu0 0.0
    %136 = vmatprep.subr.mxu0 0.0
    %137 = vmatpush1.msra.mxu0 0.0
    %138 = vmatprep.subr.mxu0 0.0
    %139 = vmatpush1.msra.mxu0 0.0
    %140 = vmatprep.subr.mxu0 0.0
    %141 = vmatpush1.msra.mxu0 0.0
    %142 = vmatprep.subr.mxu0 0.0
    %143 = vmatpush1.msra.mxu0 0.0
    %144 = vmatprep.subr.mxu0 0.0
    %145 = vmatpush1.msra.mxu0 0.0
    %146 = vmatprep.subr.mxu0 0.0
    %147 = vmatpush1.msra.mxu0 0.0
    %148 = vmatprep.subr.mxu0 0.0
    %149 = vmatpush1.msra.mxu0 0.0
    %150 = vmatprep.subr.mxu0 0.0
    %151 = vmatpush1.msra.mxu0 0.0
    %152 = vmatprep.subr.mxu0 0.0
    %153 = vmatpush1.msra.mxu0 0.0
    %154 = vmatprep.subr.mxu0 0.0
    %155 = vmatpush1.msra.mxu0 0.0
    %156 = vmatprep.subr.mxu0 0.0
    %157 = vmatpush1.msra.mxu0 0.0
    %158 = vmatprep.subr.mxu0 0.0
    %159 = vmatpush1.msra.mxu0 0.0
    %160 = vmatprep.subr.mxu0 0.0
    %161 = vmatpush1.msra.mxu0 0.0
    %162 = vmatprep.subr.mxu0 0.0
    %163 = vmatpush1.msra.mxu0 0.0
    %164 = vmatprep.subr.mxu0 0.0
    %165 = vmatpush1.msra.mxu0 0.0
    %166 = vmatprep.subr.mxu0 0.0
    %167 = vmatpush1.msra.mxu0 0.0
    %168 = vmatprep.subr.mxu0 0.0
    %169 = vmatpush1.msra.mxu0 0.0
    %170 = vmatprep.subr.mxu0 0.0
    %171 = vmatpush1.msra.mxu0 0.0
    %172 = vmatprep.subr.mxu0 0.0
    %173 = vmatpush1.msra.mxu0 0.0
    %174 = vmatprep.subr.mxu0 0.0
    %175 = vmatpush1.msra.mxu0 0.0
    %176 = vmatprep.subr.mxu0 0.0
    %177 = vmatpush1.msra.mxu0 0.0
    %178 = vmatprep.subr.mxu0 0.0
    %179 = vmatpush1.msra.mxu0 0.0
    %180 = vmatprep.subr.mxu0 0.0
    %181 = vmatpush1.msra.mxu0 0.0
    %182 = vmatprep.subr.mxu0 0.0
    %183 = vmatpush1.msra.mxu0 0.0
    %184 = vmatprep.subr.mxu0 0.0
    %185 = vmatpush1.msra.mxu0 0.0
    %186 = vmatprep.mubr.f32.mxu0 0.0
    %187 = vmatmul.mubr.f32.gmra.mrb[0].mxu0 %v120
    %v188 = vpop.f32.mrb[0].mxu0
    %v189 = vadd.f32 %v117, %v188
    %v190 = vpop.f32.mrb[0].mxu0
    %191 = vdwg.mxu0
    %vm192 = vcmask 130048
    %193 = vst.msk [vmem:[#allocation2] sm:$0xff] %vm192, %v189
    // Predicated region
    $region22: #{tpu_custom_call.1} parent=1 // pred_check
      _
    $region23: #{tpu_custom_call.1} parent=1 // pred_check_branch
      %195 = sbr.rel (0) target = $region25
    $region24: #{tpu_custom_call.1} parent=1 // pred_region
      %s197 = ssub.s32 128, 128
      %198 = vsyncadd [#allocation3], %s197
      %s200 = sshll.u32 [#allocation2], 4
      %s201 = int_to_ptr.vmem [resolvable:$true] %s200
      %203 = dma.vmem_to_hbm [thread:$0]  %s201, 128, %s5, [#allocation3]
    $region25: #{tpu_custom_call.1} parent=1 // pred_fallthru
      _
    // Predicated region
    $region26: #{tpu_custom_call.1} parent=1 // pred_check
      _
    $region27: #{tpu_custom_call.1} parent=1 // pred_check_branch
      %205 = sbr.rel (0) target = $region29
    $region28: #{tpu_custom_call.1} parent=1 // pred_region
      %206 = dma.done [#allocation3], 128
    $region29: #{tpu_custom_call.1} parent=1 // pred_fallthru
      _
    %207 = vsyncpa [#allocation3], 1

// kernel: tpu_custom_call.1
$region0: #{tpu_custom_call.1}
  #allocation0 [shape = 'u32[]', space=smem, size = 0x4, offset = 0x4, fixed_abs, tag = 'smem constant byte address 0x4 - core index']
  #allocation1 [shape = 'u32[144,128]{1,0:T(1,128)}', space=vmem, size = 0x12000, scoped, tag = 'internal scratch']
  %s0 = inlined_call_operand.vmem [shape: f32[8,32], index: 0, kind: input, shape index: {}]
  %s1 = inlined_call_operand.vmem [shape: f32[32,32], index: 1, kind: input, shape index: {}]
  %s2 = inlined_call_operand.vmem [shape: f32[1,32], index: 2, kind: input, shape index: {}]
  %s3 = inlined_call_operand.vmem [shape: f32[32,16], index: 3, kind: input, shape index: {}]
  %s4 = inlined_call_operand.vmem [shape: f32[1,16], index: 4, kind: input, shape index: {}]
  %s5 = inlined_call_operand.hbm [shape: f32[8,16], index: 5, kind: output, shape index: {}]
  %s6 = sld [smem:[#allocation0]]
  $region30: #{tpu_custom_call.1} parent=0
    _
  %s8 = ssub.s32 1, %s6
  %s9 = scalar_select 0, %s8, %s6
  $region1: #{tpu_custom_call.1} parent=0
    #allocation2 [shape = 'u8[4096]{0}', space=vmem, size = 0x1000, scoped, tag = 'output window, operand 0, single buffered']
    #allocation3 [shape = 's32[1]{0}', space=sflag, size = 0x4, scoped, tag = 'scoped memory for tpu_custom_call.1']
    %10 = vsyncpa [#allocation3], 0
    // Predicated region
    $region2: #{tpu_custom_call.1} parent=1 // pred_check
      _
    $region3: #{tpu_custom_call.1} parent=1 // pred_check_branch
      %12 = sbr.rel (0) target = $region5
    $region4: #{tpu_custom_call.1} parent=1 // pred_region
      _
    $region5: #{tpu_custom_call.1} parent=1 // pred_fallthru
      _
    // Predicated region
    $region6: #{tpu_custom_call.1} parent=1 // pred_check
      _
    $region7: #{tpu_custom_call.1} parent=1 // pred_check_branch
      %14 = sbr.rel (0) target = $region9
    $region8: #{tpu_custom_call.1} parent=1 // pred_region
      _
    $region9: #{tpu_custom_call.1} parent=1 // pred_fallthru
      _
    // Predicated region
    $region10: #{tpu_custom_call.1} parent=1 // pred_check
      _
    $region11: #{tpu_custom_call.1} parent=1 // pred_check_branch
      %16 = sbr.rel (0) target = $region13
    $region12: #{tpu_custom_call.1} parent=1 // pred_region
      _
    $region13: #{tpu_custom_call.1} parent=1 // pred_fallthru
      _
    // Predicated region
    $region14: #{tpu_custom_call.1} parent=1 // pred_check
      _
    $region15: #{tpu_custom_call.1} parent=1 // pred_check_branch
      %18 = sbr.rel (0) target = $region17
    $region16: #{tpu_custom_call.1} parent=1 // pred_region
      _
    $region17: #{tpu_custom_call.1} parent=1 // pred_fallthru
      _
    // Predicated region
    $region18: #{tpu_custom_call.1} parent=1 // pred_check
      _
    $region19: #{tpu_custom_call.1} parent=1 // pred_check_branch
      %20 = sbr.rel (0) target = $region21
    $region20: #{tpu_custom_call.1} parent=1 // pred_region
      _
    $region21: #{tpu_custom_call.1} parent=1 // pred_fallthru
      _
    %v21 = vld [vmem:[%s0] sm:$0xff]
    %v22 = vld [vmem:[%s1] sm:$0xff]
    %v23 = vld [vmem:[%s1 + $0x8] sm:$0xff]
    %v24 = vld [vmem:[%s1 + $0x10] sm:$0xff]
    %v25 = vld [vmem:[%s1 + $0x18] sm:$0xff]
    %v26 = vld [vmem:[%s2] sm:$0x1]
    %v28 = vlaneseq
    %v29 = vshrl.u32 %v28, 7
    %v30 = vsub.s32 0, %v29
    %v31 = vrot.slane %v26, %v30
    %vm33 = vcmask 261120
    %v35 = vsel %vm33, %v21, 0
    %37 = vmatprep.subr.mxu0 0.0
    %38 = vmatpush1.msra.mxu0 %v22
    %39 = vmatprep.subr.mxu0 0.0
    %40 = vmatpush1.msra.mxu0 %v23
    %41 = vmatprep.subr.mxu0 0.0
    %42 = vmatpush1.msra.mxu0 %v24
    %43 = vmatprep.subr.mxu0 0.0
    %44 = vmatpush1.msra.mxu0 %v25
    %45 = vmatprep.subr.mxu0 0.0
    %46 = vmatpush1.msra.mxu0 0.0
    %47 = vmatprep.subr.mxu0 0.0
    %48 = vmatpush1.msra.mxu0 0.0
    %49 = vmatprep.subr.mxu0 0.0
    %50 = vmatpush1.msra.mxu0 0.0
    %51 = vmatprep.subr.mxu0 0.0
    %52 = vmatpush1.msra.mxu0 0.0
    %53 = vmatprep.subr.mxu0 0.0
    %54 = vmatpush1.msra.mxu0 0.0
    %55 = vmatprep.subr.mxu0 0.0
    %56 = vmatpush1.msra.mxu0 0.0
    %57 = vmatprep.subr.mxu0 0.0
    %58 = vmatpush1.msra.mxu0 0.0
    %59 = vmatprep.subr.mxu0 0.0
    %60 = vmatpush1.msra.mxu0 0.0
    %61 = vmatprep.subr.mxu0 0.0
    %62 = vmatpush1.msra.mxu0 0.0
    %63 = vmatprep.subr.mxu0 0.0
    %64 = vmatpush1.msra.mxu0 0.0
    %65 = vmatprep.subr.mxu0 0.0
    %66 = vmatpush1.msra.mxu0 0.0
    %67 = vmatprep.subr.mxu0 0.0
    %68 = vmatpush1.msra.mxu0 0.0
    %69 = vmatprep.subr.mxu0 0.0
    %70 = vmatpush1.msra.mxu0 0.0
    %71 = vmatprep.subr.mxu0 0.0
    %72 = vmatpush1.msra.mxu0 0.0
    %73 = vmatprep.subr.mxu0 0.0
    %74 = vmatpush1.msra.mxu0 0.0
    %75 = vmatprep.subr.mxu0 0.0
    %76 = vmatpush1.msra.mxu0 0.0
    %77 = vmatprep.subr.mxu0 0.0
    %78 = vmatpush1.msra.mxu0 0.0
    %79 = vmatprep.subr.mxu0 0.0
    %80 = vmatpush1.msra.mxu0 0.0
    %81 = vmatprep.subr.mxu0 0.0
    %82 = vmatpush1.msra.mxu0 0.0
    %83 = vmatprep.subr.mxu0 0.0
    %84 = vmatpush1.msra.mxu0 0.0
    %85 = vmatprep.subr.mxu0 0.0
    %86 = vmatpush1.msra.mxu0 0.0
    %87 = vmatprep.subr.mxu0 0.0
    %88 = vmatpush1.msra.mxu0 0.0
    %89 = vmatprep.subr.mxu0 0.0
    %90 = vmatpush1.msra.mxu0 0.0
    %91 = vmatprep.subr.mxu0 0.0
    %92 = vmatpush1.msra.mxu0 0.0
    %93 = vmatprep.subr.mxu0 0.0
    %94 = vmatpush1.msra.mxu0 0.0
    %95 = vmatprep.subr.mxu0 0.0
    %96 = vmatpush1.msra.mxu0 0.0
    %97 = vmatprep.subr.mxu0 0.0
    %98 = vmatpush1.msra.mxu0 0.0
    %99 = vmatprep.subr.mxu0 0.0
    %100 = vmatpush1.msra.mxu0 0.0
    %101 = vmatprep.mubr.f32.mxu0 0.0
    %102 = vmatmul.mubr.f32.gmra.mrb[0].mxu0 %v35
    %v103 = vpop.f32.mrb[0].mxu0
    %v104 = vadd.f32 %v31, %v103
    %v105 = vpop.f32.mrb[0].mxu0
    %106 = vdwg.mxu0
    %v107 = vmax.f32 %v104, 0.0
    %v108 = vld [vmem:[%s3] sm:$0xff]
    %v109 = vld [vmem:[%s3 + $0x8] sm:$0xff]
    %v110 = vld [vmem:[%s3 + $0x10] sm:$0xff]
    %v111 = vld [vmem:[%s3 + $0x18] sm:$0xff]
    %v112 = vld [vmem:[%s4] sm:$0x1]
    %v114 = vlaneseq
    %v115 = vshrl.u32 %v114, 7
    %v116 = vsub.s32 0, %v115
    %v117 = vrot.slane %v112, %v116
    %v120 = vsel %vm33, %v107, 0
    %122 = vmatprep.subr.mxu0 0.0
    %123 = vmatpush1.msra.mxu0 %v108
    %124 = vmatprep.subr.mxu0 0.0
    %125 = vmatpush1.msra.mxu0 %v109
    %126 = vmatprep.subr.mxu0 0.0
    %127 = vmatpush1.msra.mxu0 %v110
    %128 = vmatprep.subr.mxu0 0.0
    %129 = vmatpush1.msra.mxu0 %v111
    %130 = vmatprep.subr.mxu0 0.0
    %131 = vmatpush1.msra.mxu0 0.0
    %132 = vmatprep.subr.mxu0 0.0
    %133 = vmatpush1.msra.mxu0 0.0
    %134 = vmatprep.subr.mxu0 0.0
    %135 = vmatpush1.msra.mxu0 0.0
    %136 = vmatprep.subr.mxu0 0.0
    %137 = vmatpush1.msra.mxu0 0.0
    %138 = vmatprep.subr.mxu0 0.0
    %139 = vmatpush1.msra.mxu0 0.0
    %140 = vmatprep.subr.mxu0 0.0
    %141 = vmatpush1.msra.mxu0 0.0
    %142 = vmatprep.subr.mxu0 0.0
    %143 = vmatpush1.msra.mxu0 0.0
    %144 = vmatprep.subr.mxu0 0.0
    %145 = vmatpush1.msra.mxu0 0.0
    %146 = vmatprep.subr.mxu0 0.0
    %147 = vmatpush1.msra.mxu0 0.0
    %148 = vmatprep.subr.mxu0 0.0
    %149 = vmatpush1.msra.mxu0 0.0
    %150 = vmatprep.subr.mxu0 0.0
    %151 = vmatpush1.msra.mxu0 0.0
    %152 = vmatprep.subr.mxu0 0.0
    %153 = vmatpush1.msra.mxu0 0.0
    %154 = vmatprep.subr.mxu0 0.0
    %155 = vmatpush1.msra.mxu0 0.0
    %156 = vmatprep.subr.mxu0 0.0
    %157 = vmatpush1.msra.mxu0 0.0
    %158 = vmatprep.subr.mxu0 0.0
    %159 = vmatpush1.msra.mxu0 0.0
    %160 = vmatprep.subr.mxu0 0.0
    %161 = vmatpush1.msra.mxu0 0.0
    %162 = vmatprep.subr.mxu0 0.0
    %163 = vmatpush1.msra.mxu0 0.0
    %164 = vmatprep.subr.mxu0 0.0
    %165 = vmatpush1.msra.mxu0 0.0
    %166 = vmatprep.subr.mxu0 0.0
    %167 = vmatpush1.msra.mxu0 0.0
    %168 = vmatprep.subr.mxu0 0.0
    %169 = vmatpush1.msra.mxu0 0.0
    %170 = vmatprep.subr.mxu0 0.0
    %171 = vmatpush1.msra.mxu0 0.0
    %172 = vmatprep.subr.mxu0 0.0
    %173 = vmatpush1.msra.mxu0 0.0
    %174 = vmatprep.subr.mxu0 0.0
    %175 = vmatpush1.msra.mxu0 0.0
    %176 = vmatprep.subr.mxu0 0.0
    %177 = vmatpush1.msra.mxu0 0.0
    %178 = vmatprep.subr.mxu0 0.0
    %179 = vmatpush1.msra.mxu0 0.0
    %180 = vmatprep.subr.mxu0 0.0
    %181 = vmatpush1.msra.mxu0 0.0
    %182 = vmatprep.subr.mxu0 0.0
    %183 = vmatpush1.msra.mxu0 0.0
    %184 = vmatprep.subr.mxu0 0.0
    %185 = vmatpush1.msra.mxu0 0.0
    %186 = vmatprep.mubr.f32.mxu0 0.0
    %187 = vmatmul.mubr.f32.gmra.mrb[0].mxu0 %v120
    %v188 = vpop.f32.mrb[0].mxu0
    %v189 = vadd.f32 %v117, %v188
    %v190 = vpop.f32.mrb[0].mxu0
    %191 = vdwg.mxu0
    %vm192 = vcmask 130048
    %193 = vst.msk [vmem:[#allocation2] sm:$0xff] %vm192, %v189
    // Predicated region
    $region22: #{tpu_custom_call.1} parent=1 // pred_check
      _
    $region23: #{tpu_custom_call.1} parent=1 // pred_check_branch
      %195 = sbr.rel (0) target = $region25
    $region24: #{tpu_custom_call.1} parent=1 // pred_region
      %s197 = ssub.s32 128, 128
      %198 = vsyncadd [#allocation3], %s197
      %s200 = sshll.u32 [#allocation2], 4
      %s201 = int_to_ptr.vmem [resolvable:$true] %s200
      %203 = dma.vmem_to_hbm [thread:$0]  %s201, 128, %s5, [#allocation3]
    $region25: #{tpu_custom_call.1} parent=1 // pred_fallthru
      _
    // Predicated region
    $region26: #{tpu_custom_call.1} parent=1 // pred_check
      _
    $region27: #{tpu_custom_call.1} parent=1 // pred_check_branch
      %205 = sbr.rel (0) target = $region29
    $region28: #{tpu_custom_call.1} parent=1 // pred_region
      %206 = dma.done [#allocation3], 128
    $region29: #{tpu_custom_call.1} parent=1 // pred_fallthru
      _
    %207 = vsyncpa [#allocation3], 1

</llo_original>
